<compile_context>
chip_gen: v5e
topology: v5e:2x2
jax: 0.10.0
libtpu: 0.0.40
codegen_flags: <defaults>
</compile_context>

<pallas_src>
import functools

import jax
import jax.numpy as jnp
import numpy as np
from jax import lax
from jax.experimental import pallas as pl
from jax.experimental.pallas import tpu as pltpu

LANE = 128
NEG = -1e30  # "masked" value; self-loops guarantee a valid (finite) max


def _round_up(n, m):
    return ((n + m - 1) // m) * m


def diffusion_kernel(pa_ref, times_ref, w1_ref, b1_ref, w2_ref, b2_ref,
                     w3_ref, b3_ref, adj_ref, out_ref, *,
                     t_real, d_attrs, num_zones):
    """Fused forward pass of SimplifiedDiffusionModel (one person).

    1. Build the (Tp, 128) time-major input block in-kernel.
    2. Run the 3-layer MLP for ALL timesteps as three MXU matmuls
       (Dropout layers are identity in the eval-mode forward pass).
    3. Precompute next_zone[t, z] for every (timestep, current-zone) pair,
       fully data-parallel (off the serial chain).
    4. Unrolled serial zone walk: only one (1,128) lane reduce per step.
    5. Rebuild the adjacency penalty rows from the zone sequence (off-chain)
       and write the constrained logits with a single lane-dense tile store.
    """
    Tp, Zp = out_ref.shape

    # ---- (1) input block: [person_attrs, time_t, 0...] per timestep row ----
    cols = lax.broadcasted_iota(jnp.int32, (1, Zp), 1)              # (1, 128)
    x = (jnp.where(cols < d_attrs, pa_ref[...], 0.0)
         + jnp.where(cols == d_attrs, times_ref[...], 0.0))         # (Tp, 128)

    # ---- (2) MLP: three lane-dense MXU matmuls -----------------------------
    h1 = jnp.maximum(
        jnp.dot(x, w1_ref[...], preferred_element_type=jnp.float32)
        + b1_ref[...], 0.0)                                         # (Tp, 128)
    h2 = jnp.maximum(
        jnp.dot(h1, w2_ref[...], preferred_element_type=jnp.float32)
        + b2_ref[...], 0.0)                                         # (Tp, 64)
    raw = (jnp.dot(h2, w3_ref[...], preferred_element_type=jnp.float32)
           + b3_ref[...])                                           # (Tp, 128)

    col_f = cols.astype(jnp.float32)                                # (1, 128)
    row_ids = lax.broadcasted_iota(jnp.int32, (Tp, 1), 0)           # (Tp, 1)
    adj_v = adj_ref[...]                                            # (Z, 128)
    adj_rows = [adj_v[z:z + 1, :] for z in range(num_zones)]        # (1, 128)

    # ---- (3) next_zone[t, z] for ALL pairs, data-parallel ------------------
    # nxt[t, z] = first-occurrence argmax_{z'} raw[t, z'] s.t. adj[z, z'] > 0.
    # build_adjacency always adds self-loops, so a valid candidate exists and
    # the reference's "keep current zone" fallback is unreachable.
    nxt = jnp.zeros((Tp, Zp), jnp.float32)
    for z in range(num_zones):
        masked = jnp.where(adj_rows[z] > 0.0, raw, NEG)             # (Tp, 128)
        mx = jnp.max(masked, axis=-1, keepdims=True)                # (Tp, 1)
        nz = jnp.min(jnp.where(masked == mx, col_f, float(Zp)),
                     axis=-1, keepdims=True)                        # (Tp, 1)
        nxt = jnp.where(col_f == float(z), nz, nxt)                 # lane z <- nz

    # ---- (4) serial zone walk (unrolled; t_real is static) -----------------
    # The only serial dependency is the splatted scalar `zone`; each step is
    # a VPU compare/select plus one (1,128) lane reduce.
    zone = jnp.zeros((1, 1), jnp.float32)      # current zone (splat scalar)
    zcol = jnp.zeros((Tp, 1), jnp.float32)     # zone index per timestep row
    for t in range(t_real):
        zcol = jnp.where(row_ids == t, zone, zcol)
        if t + 1 < t_real:
            picked = jnp.where(col_f == zone, nxt[t:t + 1, :], 0.0)  # (1, 128)
            zone = jnp.sum(picked, axis=-1, keepdims=True)           # (1, 1)

    # ---- (5) penalty rows rebuilt off-chain + single lane-dense store ------
    sel = jnp.zeros((Tp, Zp), jnp.float32)
    for z in range(num_zones):
        sel = jnp.where(zcol == float(z), adj_rows[z], sel)
    out_ref[...] = raw - 10.0 * (1.0 - sel)


def build_adjacency(edge_index, num_zones):
    """Symmetric adjacency with self-loops (mirrors set_graph_data)."""
    e = np.asarray(edge_index)
    adj = np.zeros((num_zones, num_zones), np.float32)
    adj[e[0], e[1]] = 1.0
    adj[e[1], e[0]] = 1.0
    adj[np.arange(num_zones), np.arange(num_zones)] = 1.0
    return adj


def prepare_model(params, edge_index, num_zones):
    """One-time packing (hoisted out of the per-call path): pads weights and
    builds the adjacency once; the cached padded constants are reused by
    every forward call."""
    w1, b1, w2, b2, w3, b3 = [np.asarray(p, np.float32) for p in params]
    d_in, h1 = w1.shape                 # (person_attrs_dim + 1, 128)
    h2 = w2.shape[1]                    # 64

    # Layer 1 stays K=128-aligned (matches the in-kernel x block); layers 2/3
    # keep their natural 64-wide dims to cut padded-weight DMA bytes.
    w1p = np.zeros((LANE, h1), np.float32)
    w1p[:d_in, :] = w1
    w3p = np.zeros((h2, LANE), np.float32)
    w3p[:, :num_zones] = w3
    b3p = np.zeros((1, LANE), np.float32)
    b3p[0, :num_zones] = b3
    adjp = np.zeros((num_zones, LANE), np.float32)
    adjp[:, :num_zones] = build_adjacency(edge_index, num_zones)

    return dict(
        w1=jnp.asarray(w1p), b1=jnp.asarray(b1.reshape(1, h1)),
        w2=jnp.asarray(w2), b2=jnp.asarray(b2.reshape(1, h2)),
        w3=jnp.asarray(w3p), b3=jnp.asarray(b3p),
        adj=jnp.asarray(adjp))


def make_forward(params, edge_index, num_zones, person_attrs_dim):
    """Returns a jitted forward(person_attrs, times) -> (zone_logits, None)."""
    prep = prepare_model(params, edge_index, num_zones)
    assert prep["w1"].shape[0] == LANE
    d = person_attrs_dim
    h1 = prep["w1"].shape[1]
    h2 = prep["w2"].shape[1]
    weight_bytes = sum(int(v.size) * 4 for v in prep.values())

    def _forward(person_attrs, times):
        T = times.shape[0]
        Tp = _round_up(T, 8)

        # Per-call packing is just these two tiny scatters (under jit).
        pa = jnp.zeros((1, LANE), jnp.float32).at[0, :d].set(
            person_attrs.astype(jnp.float32))
        tcol = jnp.zeros((Tp, 1), jnp.float32).at[:T, 0].set(
            times.astype(jnp.float32))

        kernel = functools.partial(diffusion_kernel, t_real=T, d_attrs=d,
                                   num_zones=num_zones)
        vmem = pl.BlockSpec(memory_space=pltpu.MemorySpace.VMEM)
        out = pl.pallas_call(
            kernel,
            out_shape=jax.ShapeDtypeStruct((Tp, LANE), jnp.float32),
            in_specs=[vmem] * 9,
            out_specs=vmem,
            cost_estimate=pl.CostEstimate(
                flops=2 * Tp * (LANE * h1 + h1 * h2 + h2 * LANE),
                transcendentals=0,
                bytes_accessed=weight_bytes + 4 * (LANE + Tp + Tp * LANE)),
        )(pa, tcol, prep["w1"], prep["b1"], prep["w2"], prep["b2"],
          prep["w3"], prep["b3"], prep["adj"])

        return out[:T, :num_zones], None

    return jax.jit(_forward)


def reference_forward(person_attrs, times, edge_index, params, num_zones):
    """Pure numpy replica of the PyTorch forward loop (eval mode)."""
    w1, b1, w2, b2, w3, b3 = [np.asarray(p, np.float32) for p in params]
    pa = np.asarray(person_attrs, np.float32)
    ts = np.asarray(times, np.float32)
    adj = build_adjacency(edge_index, num_zones)

    preds = []
    current_zone = 0
    for t in ts:
        inp = np.concatenate([pa, np.array([t], np.float32)])
        h1 = np.maximum(inp @ w1 + b1, 0.0)
        h2 = np.maximum(h1 @ w2 + b2, 0.0)
        raw = h2 @ w3 + b3
        adj_row = adj[current_zone]
        preds.append(raw - 10.0 * (1.0 - adj_row))
        valid = np.where(adj_row > 0)[0]
        if len(valid) > 0:
            current_zone = int(valid[np.argmax(raw[valid])])
    return np.stack(preds)


if __name__ == "__main__":
    person_attrs_dim = 8
    num_zones = 8
    T = 8

    key = jax.random.PRNGKey(0)
    ks = jax.random.split(key, 7)

    person_attrs = jax.random.normal(ks[0], (person_attrs_dim,), jnp.float32)
    times = jnp.linspace(0.0, 1.0, T, dtype=jnp.float32)
    edge_index = jnp.array([[0, 1, 2, 3, 4, 5, 6, 0],
                            [1, 2, 3, 4, 5, 6, 7, 7]], dtype=jnp.int32)

    # PyTorch Linear computes x @ W.T + b; weights here are stored already
    # transposed for x @ W.  b3 uses well-separated per-zone offsets so the
    # greedy zone walk has large decision margins, making the correctness
    # check insensitive to MXU matmul precision.
    w1 = 0.1 * jax.random.normal(ks[1], (person_attrs_dim + 1, 128), jnp.float32)
    b1 = 0.1 * jax.random.normal(ks[2], (128,), jnp.float32)
    w2 = 0.1 * jax.random.normal(ks[3], (128, 64), jnp.float32)
    b2 = 0.1 * jax.random.normal(ks[4], (64,), jnp.float32)
    w3 = 0.1 * jax.random.normal(ks[5], (64, num_zones), jnp.float32)
    b3 = (2.0 * jnp.arange(num_zones, dtype=jnp.float32)
          + 0.1 * jax.random.normal(ks[6], (num_zones,), jnp.float32))
    params = (w1, b1, w2, b2, w3, b3)

    forward = make_forward(params, edge_index, num_zones, person_attrs_dim)
    zone_logits, aux = forward(person_attrs, times)
    zone_logits = jax.block_until_ready(zone_logits)

    assert aux is None
    assert zone_logits.shape == (T, num_zones)

    ref = reference_forward(person_attrs, times, edge_index, params, num_zones)
    np.testing.assert_allclose(np.asarray(zone_logits), ref,
                               rtol=1e-2, atol=1e-2)

    print("KERNEL_OK")
</pallas_src>

<mosaic_0001>
module attributes {stable_mosaic.version = 11 : i64} {
  func.func @diffusion_kernel(%arg0: memref<1x128xf32, #tpu.memory_space<vmem>>, %arg1: memref<8x1xf32, #tpu.memory_space<vmem>>, %arg2: memref<128x128xf32, #tpu.memory_space<vmem>>, %arg3: memref<1x128xf32, #tpu.memory_space<vmem>>, %arg4: memref<128x64xf32, #tpu.memory_space<vmem>>, %arg5: memref<1x64xf32, #tpu.memory_space<vmem>>, %arg6: memref<64x128xf32, #tpu.memory_space<vmem>>, %arg7: memref<1x128xf32, #tpu.memory_space<vmem>>, %arg8: memref<8x128xf32, #tpu.memory_space<vmem>>, %arg9: memref<8x128xf32, #tpu.memory_space<vmem>>) attributes {dimension_semantics = [], scalar_prefetch = 0 : i64, scratch_operands = 0 : i64, tpu.core_type = #tpu.core_type<tc>} {
    %0 = tpu.iota {dimensions = array<i32: 1>} : vector<1x128xi32>
    %c8_i32 = arith.constant 8 : i32
    %1 = vector.broadcast %c8_i32 : i32 to vector<1x128xi32>
    %2 = arith.cmpi slt, %0, %1 : vector<1x128xi32>
    %c0 = arith.constant 0 : index
    %c0_0 = arith.constant 0 : index
    %3 = vector.load %arg0[%c0, %c0_0] : memref<1x128xf32, #tpu.memory_space<vmem>>, vector<1x128xf32>
    %cst = arith.constant 0.000000e+00 : f32
    %4 = vector.broadcast %cst : f32 to vector<1x128xf32>
    %5 = arith.select %2, %3, %4 : vector<1x128xi1>, vector<1x128xf32>
    %c8_i32_1 = arith.constant 8 : i32
    %6 = vector.broadcast %c8_i32_1 : i32 to vector<1x128xi32>
    %7 = arith.cmpi eq, %0, %6 : vector<1x128xi32>
    %c0_2 = arith.constant 0 : index
    %c0_3 = arith.constant 0 : index
    %8 = vector.load %arg1[%c0_2, %c0_3] : memref<8x1xf32, #tpu.memory_space<vmem>>, vector<8x1xf32>
    %cst_4 = arith.constant 0.000000e+00 : f32
    %9 = vector.shape_cast %7 : vector<1x128xi1> to vector<1x128xi1>
    %10 = vector.broadcast %9 : vector<1x128xi1> to vector<8x128xi1>
    %11 = vector.shape_cast %8 : vector<8x1xf32> to vector<8x1xf32>
    %12 = vector.broadcast %11 : vector<8x1xf32> to vector<8x128xf32>
    %13 = vector.broadcast %cst_4 : f32 to vector<8x128xf32>
    %14 = arith.select %10, %12, %13 : vector<8x128xi1>, vector<8x128xf32>
    %15 = vector.broadcast %5 : vector<1x128xf32> to vector<8x128xf32>
    %16 = arith.addf %15, %14 : vector<8x128xf32>
    %c0_5 = arith.constant 0 : index
    %c0_6 = arith.constant 0 : index
    %17 = vector.load %arg2[%c0_5, %c0_6] : memref<128x128xf32, #tpu.memory_space<vmem>>, vector<128x128xf32>
    %cst_7 = arith.constant dense<0.000000e+00> : vector<8x128xf32>
    %18 = tpu.matmul %16, %17, %cst_7 {dimension_numbers = #tpu.dot_dimension_numbers<[1], [0], [0], [1], [0, 0, 1, 1], [], []>} : vector<8x128xf32>, vector<128x128xf32>, vector<8x128xf32> -> vector<8x128xf32>
    %c0_8 = arith.constant 0 : index
    %c0_9 = arith.constant 0 : index
    %19 = vector.load %arg3[%c0_8, %c0_9] : memref<1x128xf32, #tpu.memory_space<vmem>>, vector<1x128xf32>
    %20 = vector.broadcast %19 : vector<1x128xf32> to vector<8x128xf32>
    %21 = arith.addf %18, %20 : vector<8x128xf32>
    %cst_10 = arith.constant 0.000000e+00 : f32
    %22 = vector.broadcast %cst_10 : f32 to vector<8x128xf32>
    %23 = arith.maximumf %21, %22 : vector<8x128xf32>
    %c0_11 = arith.constant 0 : index
    %c0_12 = arith.constant 0 : index
    %24 = vector.load %arg4[%c0_11, %c0_12] : memref<128x64xf32, #tpu.memory_space<vmem>>, vector<128x64xf32>
    %cst_13 = arith.constant dense<0.000000e+00> : vector<8x64xf32>
    %25 = tpu.matmul %23, %24, %cst_13 {dimension_numbers = #tpu.dot_dimension_numbers<[1], [0], [0], [1], [0, 0, 1, 1], [], []>} : vector<8x128xf32>, vector<128x64xf32>, vector<8x64xf32> -> vector<8x64xf32>
    %c0_14 = arith.constant 0 : index
    %c0_15 = arith.constant 0 : index
    %26 = vector.load %arg5[%c0_14, %c0_15] : memref<1x64xf32, #tpu.memory_space<vmem>>, vector<1x64xf32>
    %27 = vector.broadcast %26 : vector<1x64xf32> to vector<8x64xf32>
    %28 = arith.addf %25, %27 : vector<8x64xf32>
    %cst_16 = arith.constant 0.000000e+00 : f32
    %29 = vector.broadcast %cst_16 : f32 to vector<8x64xf32>
    %30 = arith.maximumf %28, %29 : vector<8x64xf32>
    %c0_17 = arith.constant 0 : index
    %c0_18 = arith.constant 0 : index
    %31 = vector.load %arg6[%c0_17, %c0_18] : memref<64x128xf32, #tpu.memory_space<vmem>>, vector<64x128xf32>
    %cst_19 = arith.constant dense<0.000000e+00> : vector<8x128xf32>
    %32 = tpu.matmul %30, %31, %cst_19 {dimension_numbers = #tpu.dot_dimension_numbers<[1], [0], [0], [1], [0, 0, 1, 1], [], []>} : vector<8x64xf32>, vector<64x128xf32>, vector<8x128xf32> -> vector<8x128xf32>
    %c0_20 = arith.constant 0 : index
    %c0_21 = arith.constant 0 : index
    %33 = vector.load %arg7[%c0_20, %c0_21] : memref<1x128xf32, #tpu.memory_space<vmem>>, vector<1x128xf32>
    %34 = vector.broadcast %33 : vector<1x128xf32> to vector<8x128xf32>
    %35 = arith.addf %32, %34 : vector<8x128xf32>
    %36 = arith.sitofp %0 : vector<1x128xi32> to vector<1x128xf32>
    %37 = tpu.iota {dimensions = array<i32: 0>} : vector<8x1xi32>
    %c0_22 = arith.constant 0 : index
    %c0_23 = arith.constant 0 : index
    %38 = vector.load %arg8[%c0_22, %c0_23] : memref<8x128xf32, #tpu.memory_space<vmem>>, vector<8x128xf32>
    %39 = vector.extract_strided_slice %38 {offsets = [0, 0], sizes = [1, 128], strides = [1, 1]} : vector<8x128xf32> to vector<1x128xf32>
    %40 = vector.extract_strided_slice %38 {offsets = [1, 0], sizes = [1, 128], strides = [1, 1]} : vector<8x128xf32> to vector<1x128xf32>
    %41 = vector.extract_strided_slice %38 {offsets = [2, 0], sizes = [1, 128], strides = [1, 1]} : vector<8x128xf32> to vector<1x128xf32>
    %42 = vector.extract_strided_slice %38 {offsets = [3, 0], sizes = [1, 128], strides = [1, 1]} : vector<8x128xf32> to vector<1x128xf32>
    %43 = vector.extract_strided_slice %38 {offsets = [4, 0], sizes = [1, 128], strides = [1, 1]} : vector<8x128xf32> to vector<1x128xf32>
    %44 = vector.extract_strided_slice %38 {offsets = [5, 0], sizes = [1, 128], strides = [1, 1]} : vector<8x128xf32> to vector<1x128xf32>
    %45 = vector.extract_strided_slice %38 {offsets = [6, 0], sizes = [1, 128], strides = [1, 1]} : vector<8x128xf32> to vector<1x128xf32>
    %46 = vector.extract_strided_slice %38 {offsets = [7, 0], sizes = [1, 128], strides = [1, 1]} : vector<8x128xf32> to vector<1x128xf32>
    %cst_24 = arith.constant 0.000000e+00 : f32
    %47 = vector.broadcast %cst_24 : f32 to vector<8x128xf32>
    %cst_25 = arith.constant 0.000000e+00 : f32
    %48 = vector.broadcast %cst_25 : f32 to vector<1x128xf32>
    %49 = arith.cmpf ogt, %39, %48 : vector<1x128xf32>
    %cst_26 = arith.constant -1.000000e+30 : f32
    %50 = vector.shape_cast %49 : vector<1x128xi1> to vector<1x128xi1>
    %51 = vector.broadcast %50 : vector<1x128xi1> to vector<8x128xi1>
    %52 = vector.broadcast %cst_26 : f32 to vector<8x128xf32>
    %53 = arith.select %51, %35, %52 : vector<8x128xi1>, vector<8x128xf32>
    %cst_27 = arith.constant dense<0xFF800000> : vector<8xf32>
    %54 = vector.multi_reduction <maximumf>, %53, %cst_27 [1] : vector<8x128xf32> to vector<8xf32>
    %55 = vector.shape_cast %54 : vector<8xf32> to vector<8x1xf32>
    %56 = vector.broadcast %55 : vector<8x1xf32> to vector<8x128xf32>
    %57 = arith.cmpf oeq, %53, %56 : vector<8x128xf32>
    %cst_28 = arith.constant 1.280000e+02 : f32
    %58 = vector.shape_cast %36 : vector<1x128xf32> to vector<1x128xf32>
    %59 = vector.broadcast %58 : vector<1x128xf32> to vector<8x128xf32>
    %60 = vector.broadcast %cst_28 : f32 to vector<8x128xf32>
    %61 = arith.select %57, %59, %60 : vector<8x128xi1>, vector<8x128xf32>
    %cst_29 = arith.constant dense<0x7F800000> : vector<8xf32>
    %62 = vector.multi_reduction <minimumf>, %61, %cst_29 [1] : vector<8x128xf32> to vector<8xf32>
    %63 = vector.shape_cast %62 : vector<8xf32> to vector<8x1xf32>
    %cst_30 = arith.constant 0.000000e+00 : f32
    %64 = vector.broadcast %cst_30 : f32 to vector<1x128xf32>
    %65 = arith.cmpf oeq, %36, %64 : vector<1x128xf32>
    %66 = vector.shape_cast %65 : vector<1x128xi1> to vector<1x128xi1>
    %67 = vector.broadcast %66 : vector<1x128xi1> to vector<8x128xi1>
    %68 = vector.shape_cast %63 : vector<8x1xf32> to vector<8x1xf32>
    %69 = vector.broadcast %68 : vector<8x1xf32> to vector<8x128xf32>
    %70 = arith.select %67, %69, %47 : vector<8x128xi1>, vector<8x128xf32>
    %cst_31 = arith.constant 0.000000e+00 : f32
    %71 = vector.broadcast %cst_31 : f32 to vector<1x128xf32>
    %72 = arith.cmpf ogt, %40, %71 : vector<1x128xf32>
    %cst_32 = arith.constant -1.000000e+30 : f32
    %73 = vector.shape_cast %72 : vector<1x128xi1> to vector<1x128xi1>
    %74 = vector.broadcast %73 : vector<1x128xi1> to vector<8x128xi1>
    %75 = vector.broadcast %cst_32 : f32 to vector<8x128xf32>
    %76 = arith.select %74, %35, %75 : vector<8x128xi1>, vector<8x128xf32>
    %cst_33 = arith.constant dense<0xFF800000> : vector<8xf32>
    %77 = vector.multi_reduction <maximumf>, %76, %cst_33 [1] : vector<8x128xf32> to vector<8xf32>
    %78 = vector.shape_cast %77 : vector<8xf32> to vector<8x1xf32>
    %79 = vector.broadcast %78 : vector<8x1xf32> to vector<8x128xf32>
    %80 = arith.cmpf oeq, %76, %79 : vector<8x128xf32>
    %cst_34 = arith.constant 1.280000e+02 : f32
    %81 = vector.shape_cast %36 : vector<1x128xf32> to vector<1x128xf32>
    %82 = vector.broadcast %81 : vector<1x128xf32> to vector<8x128xf32>
    %83 = vector.broadcast %cst_34 : f32 to vector<8x128xf32>
    %84 = arith.select %80, %82, %83 : vector<8x128xi1>, vector<8x128xf32>
    %cst_35 = arith.constant dense<0x7F800000> : vector<8xf32>
    %85 = vector.multi_reduction <minimumf>, %84, %cst_35 [1] : vector<8x128xf32> to vector<8xf32>
    %86 = vector.shape_cast %85 : vector<8xf32> to vector<8x1xf32>
    %cst_36 = arith.constant 1.000000e+00 : f32
    %87 = vector.broadcast %cst_36 : f32 to vector<1x128xf32>
    %88 = arith.cmpf oeq, %36, %87 : vector<1x128xf32>
    %89 = vector.shape_cast %88 : vector<1x128xi1> to vector<1x128xi1>
    %90 = vector.broadcast %89 : vector<1x128xi1> to vector<8x128xi1>
    %91 = vector.shape_cast %86 : vector<8x1xf32> to vector<8x1xf32>
    %92 = vector.broadcast %91 : vector<8x1xf32> to vector<8x128xf32>
    %93 = arith.select %90, %92, %70 : vector<8x128xi1>, vector<8x128xf32>
    %cst_37 = arith.constant 0.000000e+00 : f32
    %94 = vector.broadcast %cst_37 : f32 to vector<1x128xf32>
    %95 = arith.cmpf ogt, %41, %94 : vector<1x128xf32>
    %cst_38 = arith.constant -1.000000e+30 : f32
    %96 = vector.shape_cast %95 : vector<1x128xi1> to vector<1x128xi1>
    %97 = vector.broadcast %96 : vector<1x128xi1> to vector<8x128xi1>
    %98 = vector.broadcast %cst_38 : f32 to vector<8x128xf32>
    %99 = arith.select %97, %35, %98 : vector<8x128xi1>, vector<8x128xf32>
    %cst_39 = arith.constant dense<0xFF800000> : vector<8xf32>
    %100 = vector.multi_reduction <maximumf>, %99, %cst_39 [1] : vector<8x128xf32> to vector<8xf32>
    %101 = vector.shape_cast %100 : vector<8xf32> to vector<8x1xf32>
    %102 = vector.broadcast %101 : vector<8x1xf32> to vector<8x128xf32>
    %103 = arith.cmpf oeq, %99, %102 : vector<8x128xf32>
    %cst_40 = arith.constant 1.280000e+02 : f32
    %104 = vector.shape_cast %36 : vector<1x128xf32> to vector<1x128xf32>
    %105 = vector.broadcast %104 : vector<1x128xf32> to vector<8x128xf32>
    %106 = vector.broadcast %cst_40 : f32 to vector<8x128xf32>
    %107 = arith.select %103, %105, %106 : vector<8x128xi1>, vector<8x128xf32>
    %cst_41 = arith.constant dense<0x7F800000> : vector<8xf32>
    %108 = vector.multi_reduction <minimumf>, %107, %cst_41 [1] : vector<8x128xf32> to vector<8xf32>
    %109 = vector.shape_cast %108 : vector<8xf32> to vector<8x1xf32>
    %cst_42 = arith.constant 2.000000e+00 : f32
    %110 = vector.broadcast %cst_42 : f32 to vector<1x128xf32>
    %111 = arith.cmpf oeq, %36, %110 : vector<1x128xf32>
    %112 = vector.shape_cast %111 : vector<1x128xi1> to vector<1x128xi1>
    %113 = vector.broadcast %112 : vector<1x128xi1> to vector<8x128xi1>
    %114 = vector.shape_cast %109 : vector<8x1xf32> to vector<8x1xf32>
    %115 = vector.broadcast %114 : vector<8x1xf32> to vector<8x128xf32>
    %116 = arith.select %113, %115, %93 : vector<8x128xi1>, vector<8x128xf32>
    %cst_43 = arith.constant 0.000000e+00 : f32
    %117 = vector.broadcast %cst_43 : f32 to vector<1x128xf32>
    %118 = arith.cmpf ogt, %42, %117 : vector<1x128xf32>
    %cst_44 = arith.constant -1.000000e+30 : f32
    %119 = vector.shape_cast %118 : vector<1x128xi1> to vector<1x128xi1>
    %120 = vector.broadcast %119 : vector<1x128xi1> to vector<8x128xi1>
    %121 = vector.broadcast %cst_44 : f32 to vector<8x128xf32>
    %122 = arith.select %120, %35, %121 : vector<8x128xi1>, vector<8x128xf32>
    %cst_45 = arith.constant dense<0xFF800000> : vector<8xf32>
    %123 = vector.multi_reduction <maximumf>, %122, %cst_45 [1] : vector<8x128xf32> to vector<8xf32>
    %124 = vector.shape_cast %123 : vector<8xf32> to vector<8x1xf32>
    %125 = vector.broadcast %124 : vector<8x1xf32> to vector<8x128xf32>
    %126 = arith.cmpf oeq, %122, %125 : vector<8x128xf32>
    %cst_46 = arith.constant 1.280000e+02 : f32
    %127 = vector.shape_cast %36 : vector<1x128xf32> to vector<1x128xf32>
    %128 = vector.broadcast %127 : vector<1x128xf32> to vector<8x128xf32>
    %129 = vector.broadcast %cst_46 : f32 to vector<8x128xf32>
    %130 = arith.select %126, %128, %129 : vector<8x128xi1>, vector<8x128xf32>
    %cst_47 = arith.constant dense<0x7F800000> : vector<8xf32>
    %131 = vector.multi_reduction <minimumf>, %130, %cst_47 [1] : vector<8x128xf32> to vector<8xf32>
    %132 = vector.shape_cast %131 : vector<8xf32> to vector<8x1xf32>
    %cst_48 = arith.constant 3.000000e+00 : f32
    %133 = vector.broadcast %cst_48 : f32 to vector<1x128xf32>
    %134 = arith.cmpf oeq, %36, %133 : vector<1x128xf32>
    %135 = vector.shape_cast %134 : vector<1x128xi1> to vector<1x128xi1>
    %136 = vector.broadcast %135 : vector<1x128xi1> to vector<8x128xi1>
    %137 = vector.shape_cast %132 : vector<8x1xf32> to vector<8x1xf32>
    %138 = vector.broadcast %137 : vector<8x1xf32> to vector<8x128xf32>
    %139 = arith.select %136, %138, %116 : vector<8x128xi1>, vector<8x128xf32>
    %cst_49 = arith.constant 0.000000e+00 : f32
    %140 = vector.broadcast %cst_49 : f32 to vector<1x128xf32>
    %141 = arith.cmpf ogt, %43, %140 : vector<1x128xf32>
    %cst_50 = arith.constant -1.000000e+30 : f32
    %142 = vector.shape_cast %141 : vector<1x128xi1> to vector<1x128xi1>
    %143 = vector.broadcast %142 : vector<1x128xi1> to vector<8x128xi1>
    %144 = vector.broadcast %cst_50 : f32 to vector<8x128xf32>
    %145 = arith.select %143, %35, %144 : vector<8x128xi1>, vector<8x128xf32>
    %cst_51 = arith.constant dense<0xFF800000> : vector<8xf32>
    %146 = vector.multi_reduction <maximumf>, %145, %cst_51 [1] : vector<8x128xf32> to vector<8xf32>
    %147 = vector.shape_cast %146 : vector<8xf32> to vector<8x1xf32>
    %148 = vector.broadcast %147 : vector<8x1xf32> to vector<8x128xf32>
    %149 = arith.cmpf oeq, %145, %148 : vector<8x128xf32>
    %cst_52 = arith.constant 1.280000e+02 : f32
    %150 = vector.shape_cast %36 : vector<1x128xf32> to vector<1x128xf32>
    %151 = vector.broadcast %150 : vector<1x128xf32> to vector<8x128xf32>
    %152 = vector.broadcast %cst_52 : f32 to vector<8x128xf32>
    %153 = arith.select %149, %151, %152 : vector<8x128xi1>, vector<8x128xf32>
    %cst_53 = arith.constant dense<0x7F800000> : vector<8xf32>
    %154 = vector.multi_reduction <minimumf>, %153, %cst_53 [1] : vector<8x128xf32> to vector<8xf32>
    %155 = vector.shape_cast %154 : vector<8xf32> to vector<8x1xf32>
    %cst_54 = arith.constant 4.000000e+00 : f32
    %156 = vector.broadcast %cst_54 : f32 to vector<1x128xf32>
    %157 = arith.cmpf oeq, %36, %156 : vector<1x128xf32>
    %158 = vector.shape_cast %157 : vector<1x128xi1> to vector<1x128xi1>
    %159 = vector.broadcast %158 : vector<1x128xi1> to vector<8x128xi1>
    %160 = vector.shape_cast %155 : vector<8x1xf32> to vector<8x1xf32>
    %161 = vector.broadcast %160 : vector<8x1xf32> to vector<8x128xf32>
    %162 = arith.select %159, %161, %139 : vector<8x128xi1>, vector<8x128xf32>
    %cst_55 = arith.constant 0.000000e+00 : f32
    %163 = vector.broadcast %cst_55 : f32 to vector<1x128xf32>
    %164 = arith.cmpf ogt, %44, %163 : vector<1x128xf32>
    %cst_56 = arith.constant -1.000000e+30 : f32
    %165 = vector.shape_cast %164 : vector<1x128xi1> to vector<1x128xi1>
    %166 = vector.broadcast %165 : vector<1x128xi1> to vector<8x128xi1>
    %167 = vector.broadcast %cst_56 : f32 to vector<8x128xf32>
    %168 = arith.select %166, %35, %167 : vector<8x128xi1>, vector<8x128xf32>
    %cst_57 = arith.constant dense<0xFF800000> : vector<8xf32>
    %169 = vector.multi_reduction <maximumf>, %168, %cst_57 [1] : vector<8x128xf32> to vector<8xf32>
    %170 = vector.shape_cast %169 : vector<8xf32> to vector<8x1xf32>
    %171 = vector.broadcast %170 : vector<8x1xf32> to vector<8x128xf32>
    %172 = arith.cmpf oeq, %168, %171 : vector<8x128xf32>
    %cst_58 = arith.constant 1.280000e+02 : f32
    %173 = vector.shape_cast %36 : vector<1x128xf32> to vector<1x128xf32>
    %174 = vector.broadcast %173 : vector<1x128xf32> to vector<8x128xf32>
    %175 = vector.broadcast %cst_58 : f32 to vector<8x128xf32>
    %176 = arith.select %172, %174, %175 : vector<8x128xi1>, vector<8x128xf32>
    %cst_59 = arith.constant dense<0x7F800000> : vector<8xf32>
    %177 = vector.multi_reduction <minimumf>, %176, %cst_59 [1] : vector<8x128xf32> to vector<8xf32>
    %178 = vector.shape_cast %177 : vector<8xf32> to vector<8x1xf32>
    %cst_60 = arith.constant 5.000000e+00 : f32
    %179 = vector.broadcast %cst_60 : f32 to vector<1x128xf32>
    %180 = arith.cmpf oeq, %36, %179 : vector<1x128xf32>
    %181 = vector.shape_cast %180 : vector<1x128xi1> to vector<1x128xi1>
    %182 = vector.broadcast %181 : vector<1x128xi1> to vector<8x128xi1>
    %183 = vector.shape_cast %178 : vector<8x1xf32> to vector<8x1xf32>
    %184 = vector.broadcast %183 : vector<8x1xf32> to vector<8x128xf32>
    %185 = arith.select %182, %184, %162 : vector<8x128xi1>, vector<8x128xf32>
    %cst_61 = arith.constant 0.000000e+00 : f32
    %186 = vector.broadcast %cst_61 : f32 to vector<1x128xf32>
    %187 = arith.cmpf ogt, %45, %186 : vector<1x128xf32>
    %cst_62 = arith.constant -1.000000e+30 : f32
    %188 = vector.shape_cast %187 : vector<1x128xi1> to vector<1x128xi1>
    %189 = vector.broadcast %188 : vector<1x128xi1> to vector<8x128xi1>
    %190 = vector.broadcast %cst_62 : f32 to vector<8x128xf32>
    %191 = arith.select %189, %35, %190 : vector<8x128xi1>, vector<8x128xf32>
    %cst_63 = arith.constant dense<0xFF800000> : vector<8xf32>
    %192 = vector.multi_reduction <maximumf>, %191, %cst_63 [1] : vector<8x128xf32> to vector<8xf32>
    %193 = vector.shape_cast %192 : vector<8xf32> to vector<8x1xf32>
    %194 = vector.broadcast %193 : vector<8x1xf32> to vector<8x128xf32>
    %195 = arith.cmpf oeq, %191, %194 : vector<8x128xf32>
    %cst_64 = arith.constant 1.280000e+02 : f32
    %196 = vector.shape_cast %36 : vector<1x128xf32> to vector<1x128xf32>
    %197 = vector.broadcast %196 : vector<1x128xf32> to vector<8x128xf32>
    %198 = vector.broadcast %cst_64 : f32 to vector<8x128xf32>
    %199 = arith.select %195, %197, %198 : vector<8x128xi1>, vector<8x128xf32>
    %cst_65 = arith.constant dense<0x7F800000> : vector<8xf32>
    %200 = vector.multi_reduction <minimumf>, %199, %cst_65 [1] : vector<8x128xf32> to vector<8xf32>
    %201 = vector.shape_cast %200 : vector<8xf32> to vector<8x1xf32>
    %cst_66 = arith.constant 6.000000e+00 : f32
    %202 = vector.broadcast %cst_66 : f32 to vector<1x128xf32>
    %203 = arith.cmpf oeq, %36, %202 : vector<1x128xf32>
    %204 = vector.shape_cast %203 : vector<1x128xi1> to vector<1x128xi1>
    %205 = vector.broadcast %204 : vector<1x128xi1> to vector<8x128xi1>
    %206 = vector.shape_cast %201 : vector<8x1xf32> to vector<8x1xf32>
    %207 = vector.broadcast %206 : vector<8x1xf32> to vector<8x128xf32>
    %208 = arith.select %205, %207, %185 : vector<8x128xi1>, vector<8x128xf32>
    %cst_67 = arith.constant 0.000000e+00 : f32
    %209 = vector.broadcast %cst_67 : f32 to vector<1x128xf32>
    %210 = arith.cmpf ogt, %46, %209 : vector<1x128xf32>
    %cst_68 = arith.constant -1.000000e+30 : f32
    %211 = vector.shape_cast %210 : vector<1x128xi1> to vector<1x128xi1>
    %212 = vector.broadcast %211 : vector<1x128xi1> to vector<8x128xi1>
    %213 = vector.broadcast %cst_68 : f32 to vector<8x128xf32>
    %214 = arith.select %212, %35, %213 : vector<8x128xi1>, vector<8x128xf32>
    %cst_69 = arith.constant dense<0xFF800000> : vector<8xf32>
    %215 = vector.multi_reduction <maximumf>, %214, %cst_69 [1] : vector<8x128xf32> to vector<8xf32>
    %216 = vector.shape_cast %215 : vector<8xf32> to vector<8x1xf32>
    %217 = vector.broadcast %216 : vector<8x1xf32> to vector<8x128xf32>
    %218 = arith.cmpf oeq, %214, %217 : vector<8x128xf32>
    %cst_70 = arith.constant 1.280000e+02 : f32
    %219 = vector.shape_cast %36 : vector<1x128xf32> to vector<1x128xf32>
    %220 = vector.broadcast %219 : vector<1x128xf32> to vector<8x128xf32>
    %221 = vector.broadcast %cst_70 : f32 to vector<8x128xf32>
    %222 = arith.select %218, %220, %221 : vector<8x128xi1>, vector<8x128xf32>
    %cst_71 = arith.constant dense<0x7F800000> : vector<8xf32>
    %223 = vector.multi_reduction <minimumf>, %222, %cst_71 [1] : vector<8x128xf32> to vector<8xf32>
    %224 = vector.shape_cast %223 : vector<8xf32> to vector<8x1xf32>
    %cst_72 = arith.constant 7.000000e+00 : f32
    %225 = vector.broadcast %cst_72 : f32 to vector<1x128xf32>
    %226 = arith.cmpf oeq, %36, %225 : vector<1x128xf32>
    %227 = vector.shape_cast %226 : vector<1x128xi1> to vector<1x128xi1>
    %228 = vector.broadcast %227 : vector<1x128xi1> to vector<8x128xi1>
    %229 = vector.shape_cast %224 : vector<8x1xf32> to vector<8x1xf32>
    %230 = vector.broadcast %229 : vector<8x1xf32> to vector<8x128xf32>
    %231 = arith.select %228, %230, %208 : vector<8x128xi1>, vector<8x128xf32>
    %cst_73 = arith.constant 0.000000e+00 : f32
    %232 = vector.broadcast %cst_73 : f32 to vector<1x1xf32>
    %cst_74 = arith.constant 0.000000e+00 : f32
    %233 = vector.broadcast %cst_74 : f32 to vector<8x1xf32>
    %c0_i32 = arith.constant 0 : i32
    %234 = vector.broadcast %c0_i32 : i32 to vector<8x1xi32>
    %235 = arith.cmpi eq, %37, %234 : vector<8x1xi32>
    %236 = vector.shape_cast %232 : vector<1x1xf32> to vector<1x1xf32>
    %237 = vector.broadcast %236 : vector<1x1xf32> to vector<8x1xf32>
    %238 = arith.select %235, %237, %233 : vector<8x1xi1>, vector<8x1xf32>
    %239 = vector.broadcast %232 : vector<1x1xf32> to vector<1x128xf32>
    %240 = arith.cmpf oeq, %36, %239 : vector<1x128xf32>
    %241 = vector.extract_strided_slice %231 {offsets = [0, 0], sizes = [1, 128], strides = [1, 1]} : vector<8x128xf32> to vector<1x128xf32>
    %cst_75 = arith.constant 0.000000e+00 : f32
    %242 = vector.broadcast %cst_75 : f32 to vector<1x128xf32>
    %243 = arith.select %240, %241, %242 : vector<1x128xi1>, vector<1x128xf32>
    %cst_76 = arith.constant dense<0.000000e+00> : vector<1xf32>
    %244 = vector.multi_reduction <add>, %243, %cst_76 [1] : vector<1x128xf32> to vector<1xf32>
    %245 = vector.shape_cast %244 : vector<1xf32> to vector<1x1xf32>
    %c1_i32 = arith.constant 1 : i32
    %246 = vector.broadcast %c1_i32 : i32 to vector<8x1xi32>
    %247 = arith.cmpi eq, %37, %246 : vector<8x1xi32>
    %248 = vector.shape_cast %245 : vector<1x1xf32> to vector<1x1xf32>
    %249 = vector.broadcast %248 : vector<1x1xf32> to vector<8x1xf32>
    %250 = arith.select %247, %249, %238 : vector<8x1xi1>, vector<8x1xf32>
    %251 = vector.broadcast %245 : vector<1x1xf32> to vector<1x128xf32>
    %252 = arith.cmpf oeq, %36, %251 : vector<1x128xf32>
    %253 = vector.extract_strided_slice %231 {offsets = [1, 0], sizes = [1, 128], strides = [1, 1]} : vector<8x128xf32> to vector<1x128xf32>
    %cst_77 = arith.constant 0.000000e+00 : f32
    %254 = vector.broadcast %cst_77 : f32 to vector<1x128xf32>
    %255 = arith.select %252, %253, %254 : vector<1x128xi1>, vector<1x128xf32>
    %cst_78 = arith.constant dense<0.000000e+00> : vector<1xf32>
    %256 = vector.multi_reduction <add>, %255, %cst_78 [1] : vector<1x128xf32> to vector<1xf32>
    %257 = vector.shape_cast %256 : vector<1xf32> to vector<1x1xf32>
    %c2_i32 = arith.constant 2 : i32
    %258 = vector.broadcast %c2_i32 : i32 to vector<8x1xi32>
    %259 = arith.cmpi eq, %37, %258 : vector<8x1xi32>
    %260 = vector.shape_cast %257 : vector<1x1xf32> to vector<1x1xf32>
    %261 = vector.broadcast %260 : vector<1x1xf32> to vector<8x1xf32>
    %262 = arith.select %259, %261, %250 : vector<8x1xi1>, vector<8x1xf32>
    %263 = vector.broadcast %257 : vector<1x1xf32> to vector<1x128xf32>
    %264 = arith.cmpf oeq, %36, %263 : vector<1x128xf32>
    %265 = vector.extract_strided_slice %231 {offsets = [2, 0], sizes = [1, 128], strides = [1, 1]} : vector<8x128xf32> to vector<1x128xf32>
    %cst_79 = arith.constant 0.000000e+00 : f32
    %266 = vector.broadcast %cst_79 : f32 to vector<1x128xf32>
    %267 = arith.select %264, %265, %266 : vector<1x128xi1>, vector<1x128xf32>
    %cst_80 = arith.constant dense<0.000000e+00> : vector<1xf32>
    %268 = vector.multi_reduction <add>, %267, %cst_80 [1] : vector<1x128xf32> to vector<1xf32>
    %269 = vector.shape_cast %268 : vector<1xf32> to vector<1x1xf32>
    %c3_i32 = arith.constant 3 : i32
    %270 = vector.broadcast %c3_i32 : i32 to vector<8x1xi32>
    %271 = arith.cmpi eq, %37, %270 : vector<8x1xi32>
    %272 = vector.shape_cast %269 : vector<1x1xf32> to vector<1x1xf32>
    %273 = vector.broadcast %272 : vector<1x1xf32> to vector<8x1xf32>
    %274 = arith.select %271, %273, %262 : vector<8x1xi1>, vector<8x1xf32>
    %275 = vector.broadcast %269 : vector<1x1xf32> to vector<1x128xf32>
    %276 = arith.cmpf oeq, %36, %275 : vector<1x128xf32>
    %277 = vector.extract_strided_slice %231 {offsets = [3, 0], sizes = [1, 128], strides = [1, 1]} : vector<8x128xf32> to vector<1x128xf32>
    %cst_81 = arith.constant 0.000000e+00 : f32
    %278 = vector.broadcast %cst_81 : f32 to vector<1x128xf32>
    %279 = arith.select %276, %277, %278 : vector<1x128xi1>, vector<1x128xf32>
    %cst_82 = arith.constant dense<0.000000e+00> : vector<1xf32>
    %280 = vector.multi_reduction <add>, %279, %cst_82 [1] : vector<1x128xf32> to vector<1xf32>
    %281 = vector.shape_cast %280 : vector<1xf32> to vector<1x1xf32>
    %c4_i32 = arith.constant 4 : i32
    %282 = vector.broadcast %c4_i32 : i32 to vector<8x1xi32>
    %283 = arith.cmpi eq, %37, %282 : vector<8x1xi32>
    %284 = vector.shape_cast %281 : vector<1x1xf32> to vector<1x1xf32>
    %285 = vector.broadcast %284 : vector<1x1xf32> to vector<8x1xf32>
    %286 = arith.select %283, %285, %274 : vector<8x1xi1>, vector<8x1xf32>
    %287 = vector.broadcast %281 : vector<1x1xf32> to vector<1x128xf32>
    %288 = arith.cmpf oeq, %36, %287 : vector<1x128xf32>
    %289 = vector.extract_strided_slice %231 {offsets = [4, 0], sizes = [1, 128], strides = [1, 1]} : vector<8x128xf32> to vector<1x128xf32>
    %cst_83 = arith.constant 0.000000e+00 : f32
    %290 = vector.broadcast %cst_83 : f32 to vector<1x128xf32>
    %291 = arith.select %288, %289, %290 : vector<1x128xi1>, vector<1x128xf32>
    %cst_84 = arith.constant dense<0.000000e+00> : vector<1xf32>
    %292 = vector.multi_reduction <add>, %291, %cst_84 [1] : vector<1x128xf32> to vector<1xf32>
    %293 = vector.shape_cast %292 : vector<1xf32> to vector<1x1xf32>
    %c5_i32 = arith.constant 5 : i32
    %294 = vector.broadcast %c5_i32 : i32 to vector<8x1xi32>
    %295 = arith.cmpi eq, %37, %294 : vector<8x1xi32>
    %296 = vector.shape_cast %293 : vector<1x1xf32> to vector<1x1xf32>
    %297 = vector.broadcast %296 : vector<1x1xf32> to vector<8x1xf32>
    %298 = arith.select %295, %297, %286 : vector<8x1xi1>, vector<8x1xf32>
    %299 = vector.broadcast %293 : vector<1x1xf32> to vector<1x128xf32>
    %300 = arith.cmpf oeq, %36, %299 : vector<1x128xf32>
    %301 = vector.extract_strided_slice %231 {offsets = [5, 0], sizes = [1, 128], strides = [1, 1]} : vector<8x128xf32> to vector<1x128xf32>
    %cst_85 = arith.constant 0.000000e+00 : f32
    %302 = vector.broadcast %cst_85 : f32 to vector<1x128xf32>
    %303 = arith.select %300, %301, %302 : vector<1x128xi1>, vector<1x128xf32>
    %cst_86 = arith.constant dense<0.000000e+00> : vector<1xf32>
    %304 = vector.multi_reduction <add>, %303, %cst_86 [1] : vector<1x128xf32> to vector<1xf32>
    %305 = vector.shape_cast %304 : vector<1xf32> to vector<1x1xf32>
    %c6_i32 = arith.constant 6 : i32
    %306 = vector.broadcast %c6_i32 : i32 to vector<8x1xi32>
    %307 = arith.cmpi eq, %37, %306 : vector<8x1xi32>
    %308 = vector.shape_cast %305 : vector<1x1xf32> to vector<1x1xf32>
    %309 = vector.broadcast %308 : vector<1x1xf32> to vector<8x1xf32>
    %310 = arith.select %307, %309, %298 : vector<8x1xi1>, vector<8x1xf32>
    %311 = vector.broadcast %305 : vector<1x1xf32> to vector<1x128xf32>
    %312 = arith.cmpf oeq, %36, %311 : vector<1x128xf32>
    %313 = vector.extract_strided_slice %231 {offsets = [6, 0], sizes = [1, 128], strides = [1, 1]} : vector<8x128xf32> to vector<1x128xf32>
    %cst_87 = arith.constant 0.000000e+00 : f32
    %314 = vector.broadcast %cst_87 : f32 to vector<1x128xf32>
    %315 = arith.select %312, %313, %314 : vector<1x128xi1>, vector<1x128xf32>
    %cst_88 = arith.constant dense<0.000000e+00> : vector<1xf32>
    %316 = vector.multi_reduction <add>, %315, %cst_88 [1] : vector<1x128xf32> to vector<1xf32>
    %317 = vector.shape_cast %316 : vector<1xf32> to vector<1x1xf32>
    %c7_i32 = arith.constant 7 : i32
    %318 = vector.broadcast %c7_i32 : i32 to vector<8x1xi32>
    %319 = arith.cmpi eq, %37, %318 : vector<8x1xi32>
    %320 = vector.shape_cast %317 : vector<1x1xf32> to vector<1x1xf32>
    %321 = vector.broadcast %320 : vector<1x1xf32> to vector<8x1xf32>
    %322 = arith.select %319, %321, %310 : vector<8x1xi1>, vector<8x1xf32>
    %cst_89 = arith.constant 0.000000e+00 : f32
    %323 = vector.broadcast %cst_89 : f32 to vector<8x128xf32>
    %cst_90 = arith.constant 0.000000e+00 : f32
    %324 = vector.broadcast %cst_90 : f32 to vector<8x1xf32>
    %325 = arith.cmpf oeq, %322, %324 : vector<8x1xf32>
    %326 = vector.shape_cast %325 : vector<8x1xi1> to vector<8x1xi1>
    %327 = vector.broadcast %326 : vector<8x1xi1> to vector<8x128xi1>
    %328 = vector.shape_cast %39 : vector<1x128xf32> to vector<1x128xf32>
    %329 = vector.broadcast %328 : vector<1x128xf32> to vector<8x128xf32>
    %330 = arith.select %327, %329, %323 : vector<8x128xi1>, vector<8x128xf32>
    %cst_91 = arith.constant 1.000000e+00 : f32
    %331 = vector.broadcast %cst_91 : f32 to vector<8x1xf32>
    %332 = arith.cmpf oeq, %322, %331 : vector<8x1xf32>
    %333 = vector.shape_cast %332 : vector<8x1xi1> to vector<8x1xi1>
    %334 = vector.broadcast %333 : vector<8x1xi1> to vector<8x128xi1>
    %335 = vector.shape_cast %40 : vector<1x128xf32> to vector<1x128xf32>
    %336 = vector.broadcast %335 : vector<1x128xf32> to vector<8x128xf32>
    %337 = arith.select %334, %336, %330 : vector<8x128xi1>, vector<8x128xf32>
    %cst_92 = arith.constant 2.000000e+00 : f32
    %338 = vector.broadcast %cst_92 : f32 to vector<8x1xf32>
    %339 = arith.cmpf oeq, %322, %338 : vector<8x1xf32>
    %340 = vector.shape_cast %339 : vector<8x1xi1> to vector<8x1xi1>
    %341 = vector.broadcast %340 : vector<8x1xi1> to vector<8x128xi1>
    %342 = vector.shape_cast %41 : vector<1x128xf32> to vector<1x128xf32>
    %343 = vector.broadcast %342 : vector<1x128xf32> to vector<8x128xf32>
    %344 = arith.select %341, %343, %337 : vector<8x128xi1>, vector<8x128xf32>
    %cst_93 = arith.constant 3.000000e+00 : f32
    %345 = vector.broadcast %cst_93 : f32 to vector<8x1xf32>
    %346 = arith.cmpf oeq, %322, %345 : vector<8x1xf32>
    %347 = vector.shape_cast %346 : vector<8x1xi1> to vector<8x1xi1>
    %348 = vector.broadcast %347 : vector<8x1xi1> to vector<8x128xi1>
    %349 = vector.shape_cast %42 : vector<1x128xf32> to vector<1x128xf32>
    %350 = vector.broadcast %349 : vector<1x128xf32> to vector<8x128xf32>
    %351 = arith.select %348, %350, %344 : vector<8x128xi1>, vector<8x128xf32>
    %cst_94 = arith.constant 4.000000e+00 : f32
    %352 = vector.broadcast %cst_94 : f32 to vector<8x1xf32>
    %353 = arith.cmpf oeq, %322, %352 : vector<8x1xf32>
    %354 = vector.shape_cast %353 : vector<8x1xi1> to vector<8x1xi1>
    %355 = vector.broadcast %354 : vector<8x1xi1> to vector<8x128xi1>
    %356 = vector.shape_cast %43 : vector<1x128xf32> to vector<1x128xf32>
    %357 = vector.broadcast %356 : vector<1x128xf32> to vector<8x128xf32>
    %358 = arith.select %355, %357, %351 : vector<8x128xi1>, vector<8x128xf32>
    %cst_95 = arith.constant 5.000000e+00 : f32
    %359 = vector.broadcast %cst_95 : f32 to vector<8x1xf32>
    %360 = arith.cmpf oeq, %322, %359 : vector<8x1xf32>
    %361 = vector.shape_cast %360 : vector<8x1xi1> to vector<8x1xi1>
    %362 = vector.broadcast %361 : vector<8x1xi1> to vector<8x128xi1>
    %363 = vector.shape_cast %44 : vector<1x128xf32> to vector<1x128xf32>
    %364 = vector.broadcast %363 : vector<1x128xf32> to vector<8x128xf32>
    %365 = arith.select %362, %364, %358 : vector<8x128xi1>, vector<8x128xf32>
    %cst_96 = arith.constant 6.000000e+00 : f32
    %366 = vector.broadcast %cst_96 : f32 to vector<8x1xf32>
    %367 = arith.cmpf oeq, %322, %366 : vector<8x1xf32>
    %368 = vector.shape_cast %367 : vector<8x1xi1> to vector<8x1xi1>
    %369 = vector.broadcast %368 : vector<8x1xi1> to vector<8x128xi1>
    %370 = vector.shape_cast %45 : vector<1x128xf32> to vector<1x128xf32>
    %371 = vector.broadcast %370 : vector<1x128xf32> to vector<8x128xf32>
    %372 = arith.select %369, %371, %365 : vector<8x128xi1>, vector<8x128xf32>
    %cst_97 = arith.constant 7.000000e+00 : f32
    %373 = vector.broadcast %cst_97 : f32 to vector<8x1xf32>
    %374 = arith.cmpf oeq, %322, %373 : vector<8x1xf32>
    %375 = vector.shape_cast %374 : vector<8x1xi1> to vector<8x1xi1>
    %376 = vector.broadcast %375 : vector<8x1xi1> to vector<8x128xi1>
    %377 = vector.shape_cast %46 : vector<1x128xf32> to vector<1x128xf32>
    %378 = vector.broadcast %377 : vector<1x128xf32> to vector<8x128xf32>
    %379 = arith.select %376, %378, %372 : vector<8x128xi1>, vector<8x128xf32>
    %cst_98 = arith.constant 1.000000e+00 : f32
    %380 = vector.broadcast %cst_98 : f32 to vector<8x128xf32>
    %381 = arith.subf %380, %379 : vector<8x128xf32>
    %cst_99 = arith.constant 1.000000e+01 : f32
    %382 = vector.broadcast %cst_99 : f32 to vector<8x128xf32>
    %383 = arith.mulf %382, %381 : vector<8x128xf32>
    %384 = arith.subf %35, %383 : vector<8x128xf32>
    %c0_100 = arith.constant 0 : index
    %c0_101 = arith.constant 0 : index
    %385 = vector.load %arg9[%c0_100, %c0_101] : memref<8x128xf32, #tpu.memory_space<vmem>>, vector<8x128xf32>
    tpu.vector_store %arg9[%c0_100, %c0_101], %384 {strides = array<i32>} : memref<8x128xf32, #tpu.memory_space<vmem>>, vector<8x128xf32>,
    return
  }
}

</mosaic_0001>

<llo_original>
// kernel: _forward.1
$region0: #{_forward.1}
  #allocation0 [shape = 'u32[]', space=smem, size = 0x4, offset = 0x4, fixed_abs, tag = 'smem constant byte address 0x4 - core index']
  #allocation1 [shape = 'u32[72,128]{1,0:T(1,128)}', space=vmem, size = 0x9000, scoped, tag = 'internal scratch']
  %s0 = inlined_call_operand.vmem [shape: f32[1,128], index: 0, kind: input, shape index: {}]
  %s1 = inlined_call_operand.vmem [shape: f32[8,1], index: 1, kind: input, shape index: {}]
  %s2 = inlined_call_operand.hbm [shape: f32[128,128], index: 2, kind: input, shape index: {}]
  %s3 = inlined_call_operand.vmem [shape: f32[1,128], index: 3, kind: input, shape index: {}]
  %s4 = inlined_call_operand.hbm [shape: f32[128,64], index: 4, kind: input, shape index: {}]
  %s5 = inlined_call_operand.vmem [shape: f32[1,64], index: 5, kind: input, shape index: {}]
  %s6 = inlined_call_operand.hbm [shape: f32[64,128], index: 6, kind: input, shape index: {}]
  %s7 = inlined_call_operand.vmem [shape: f32[1,128], index: 7, kind: input, shape index: {}]
  %s8 = inlined_call_operand.vmem [shape: f32[8,128], index: 8, kind: input, shape index: {}]
  %s9 = inlined_call_operand.hbm [shape: f32[8,128], index: 9, kind: output, shape index: {}]
  %s10 = sld [smem:[#allocation0]]
  $region58: #{_forward.1} parent=0
    _
  %s12 = ssub.s32 1, %s10
  %s13 = scalar_select 0, %s12, %s10
  $region1: #{_forward.1} parent=0
    #allocation2 [shape = 'u8[65536]{0}', space=vmem, size = 0x10000, scoped, tag = 'input window, operand 2, single buffered']
    #allocation3 [shape = 's32[1]{0}', space=sflag, size = 0x4, scoped, tag = 'scoped memory for _forward.1']
    #allocation4 [shape = 's32[1]{0}', space=sflag, size = 0x4, scoped, tag = 'scoped memory for _forward.1']
    #allocation5 [shape = 'u8[65536]{0}', space=vmem, size = 0x10000, scoped, tag = 'input window, operand 4, single buffered']
    #allocation6 [shape = 's32[1]{0}', space=sflag, size = 0x4, scoped, tag = 'scoped memory for _forward.1']
    #allocation7 [shape = 'u8[32768]{0}', space=vmem, size = 0x8000, scoped, tag = 'input window, operand 6, single buffered']
    #allocation8 [shape = 'u8[4096]{0}', space=vmem, size = 0x1000, scoped, tag = 'output window, operand 0, single buffered']
    %14 = vsyncpa [#allocation3], 0
    %15 = vsyncpa [#allocation6], 0
    %16 = vsyncpa [#allocation4], 0
    // Predicated region
    $region2: #{_forward.1} parent=1 // pred_check
      _
    $region3: #{_forward.1} parent=1 // pred_check_branch
      %18 = sbr.rel (0) target = $region5
    $region4: #{_forward.1} parent=1 // pred_region
      _
    $region5: #{_forward.1} parent=1 // pred_fallthru
      _
    // Predicated region
    $region6: #{_forward.1} parent=1 // pred_check
      _
    $region7: #{_forward.1} parent=1 // pred_check_branch
      %20 = sbr.rel (0) target = $region9
    $region8: #{_forward.1} parent=1 // pred_region
      _
    $region9: #{_forward.1} parent=1 // pred_fallthru
      _
    // Predicated region
    $region10: #{_forward.1} parent=1 // pred_check
      _
    $region11: #{_forward.1} parent=1 // pred_check_branch
      %22 = sbr.rel (0) target = $region13
    $region12: #{_forward.1} parent=1 // pred_region
      %24 = vsyncadd [#allocation3], 0
      %s25 = sshll.u32 %s2, 4
      %s26 = int_to_ptr.hbm [resolvable:$true] %s25
      %s27 = sshll.u32 [#allocation2], 4
      %s28 = int_to_ptr.vmem [resolvable:$true] %s27
      %33 = dma.hbm_to_vmem [thread:$0]  %s26, 2048, %s28, [#allocation3], 128, 128, 8
    $region13: #{_forward.1} parent=1 // pred_fallthru
      _
    // Predicated region
    $region14: #{_forward.1} parent=1 // pred_check
      _
    $region15: #{_forward.1} parent=1 // pred_check_branch
      %35 = sbr.rel (0) target = $region17
    $region16: #{_forward.1} parent=1 // pred_region
      _
    $region17: #{_forward.1} parent=1 // pred_fallthru
      _
    // Predicated region
    $region18: #{_forward.1} parent=1 // pred_check
      _
    $region19: #{_forward.1} parent=1 // pred_check_branch
      %37 = sbr.rel (0) target = $region21
    $region20: #{_forward.1} parent=1 // pred_region
      %39 = vsyncadd [#allocation6], 0
      %s40 = sshll.u32 %s4, 4
      %s41 = int_to_ptr.hbm [resolvable:$true] %s40
      %s42 = sshll.u32 [#allocation5], 4
      %s43 = int_to_ptr.vmem [resolvable:$true] %s42
      %48 = dma.hbm_to_vmem [thread:$0]  %s41, 2048, %s43, [#allocation6], 128, 128, 8
    $region21: #{_forward.1} parent=1 // pred_fallthru
      _
    // Predicated region
    $region22: #{_forward.1} parent=1 // pred_check
      _
    $region23: #{_forward.1} parent=1 // pred_check_branch
      %50 = sbr.rel (0) target = $region25
    $region24: #{_forward.1} parent=1 // pred_region
      _
    $region25: #{_forward.1} parent=1 // pred_fallthru
      _
    // Predicated region
    $region26: #{_forward.1} parent=1 // pred_check
      _
    $region27: #{_forward.1} parent=1 // pred_check_branch
      %52 = sbr.rel (0) target = $region29
    $region28: #{_forward.1} parent=1 // pred_region
      %54 = vsyncadd [#allocation6], 0
      %s55 = sshll.u32 %s6, 4
      %s56 = int_to_ptr.hbm [resolvable:$true] %s55
      %s57 = sshll.u32 [#allocation7], 4
      %s58 = int_to_ptr.vmem [resolvable:$true] %s57
      %63 = dma.hbm_to_vmem [thread:$0]  %s56, 1024, %s58, [#allocation6], 128, 128, 8
    $region29: #{_forward.1} parent=1 // pred_fallthru
      _
    // Predicated region
    $region30: #{_forward.1} parent=1 // pred_check
      _
    $region31: #{_forward.1} parent=1 // pred_check_branch
      %65 = sbr.rel (0) target = $region33
    $region32: #{_forward.1} parent=1 // pred_region
      _
    $region33: #{_forward.1} parent=1 // pred_fallthru
      _
    // Predicated region
    $region34: #{_forward.1} parent=1 // pred_check
      _
    $region35: #{_forward.1} parent=1 // pred_check_branch
      %67 = sbr.rel (0) target = $region37
    $region36: #{_forward.1} parent=1 // pred_region
      _
    $region37: #{_forward.1} parent=1 // pred_fallthru
      _
    // Predicated region
    $region38: #{_forward.1} parent=1 // pred_check
      _
    $region39: #{_forward.1} parent=1 // pred_check_branch
      %69 = sbr.rel (0) target = $region41
    $region40: #{_forward.1} parent=1 // pred_region
      %71 = dma.done [#allocation3], 2048
    $region41: #{_forward.1} parent=1 // pred_fallthru
      _
    // Predicated region
    $region42: #{_forward.1} parent=1 // pred_check
      _
    $region43: #{_forward.1} parent=1 // pred_check_branch
      %73 = sbr.rel (0) target = $region45
    $region44: #{_forward.1} parent=1 // pred_region
      %75 = dma.done [#allocation6], 2048
    $region45: #{_forward.1} parent=1 // pred_fallthru
      _
    // Predicated region
    $region46: #{_forward.1} parent=1 // pred_check
      _
    $region47: #{_forward.1} parent=1 // pred_check_branch
      %77 = sbr.rel (0) target = $region49
    $region48: #{_forward.1} parent=1 // pred_region
      %79 = dma.done [#allocation6], 1024
    $region49: #{_forward.1} parent=1 // pred_fallthru
      _
    %v80 = vlaneseq
    %v81 = vand.u32 %v80, 127
    %vm82 = vcmp.lt.s32.totalorder %v81, 8
    %v83 = vld [vmem:[%s0] sm:$0x1]
    %v84 = vsel %vm82, %v83, 0.0
    %vm85 = vcmp.eq.s32.totalorder %v81, 8
    %v86 = vld [vmem:[%s1] sm:$0xff]
    %v87 = vsel %vm85, 1, 0
    %vm88 = vcmp.eq.s32.totalorder %v87, 1
    %90 = vset.pattern.permute.xlu0 0
    %91 = vperm.xlu0 %90, %v86
    %v92 = vpop.permute.xlu0 %91
    %v94 = vsel %vm88, %v92, 0.0
    %v95 = vperm.slane %v84, 0
    %v96 = vadd.f32 %v95, %v94
    %v97 = vld [vmem:[#allocation2] sm:$0xff]
    %v98 = vld [vmem:[#allocation2 + $0x8] sm:$0xff]
    %v99 = vld [vmem:[#allocation2 + $0x10] sm:$0xff]
    %v100 = vld [vmem:[#allocation2 + $0x18] sm:$0xff]
    %v101 = vld [vmem:[#allocation2 + $0x20] sm:$0xff]
    %v102 = vld [vmem:[#allocation2 + $0x28] sm:$0xff]
    %v103 = vld [vmem:[#allocation2 + $0x30] sm:$0xff]
    %v104 = vld [vmem:[#allocation2 + $0x38] sm:$0xff]
    %v105 = vld [vmem:[#allocation2 + $0x40] sm:$0xff]
    %v106 = vld [vmem:[#allocation2 + $0x48] sm:$0xff]
    %v107 = vld [vmem:[#allocation2 + $0x50] sm:$0xff]
    %v108 = vld [vmem:[#allocation2 + $0x58] sm:$0xff]
    %v109 = vld [vmem:[#allocation2 + $0x60] sm:$0xff]
    %v110 = vld [vmem:[#allocation2 + $0x68] sm:$0xff]
    %v111 = vld [vmem:[#allocation2 + $0x70] sm:$0xff]
    %v112 = vld [vmem:[#allocation2 + $0x78] sm:$0xff]
    %v113 = vld [vmem:[%s3] sm:$0x1]
    %v115 = vperm.slane %v113, 0
    %117 = vmatpush.msra.mxu0 %v112
    %118 = vmatpush.msra.mxu0 %v111
    %119 = vmatpush.msra.mxu0 %v110
    %120 = vmatpush.msra.mxu0 %v109
    %121 = vmatpush.msra.mxu0 %v108
    %122 = vmatpush.msra.mxu0 %v107
    %123 = vmatpush.msra.mxu0 %v106
    %124 = vmatpush.msra.mxu0 %v105
    %125 = vmatpush.msra.mxu0 %v104
    %126 = vmatpush.msra.mxu0 %v103
    %127 = vmatpush.msra.mxu0 %v102
    %128 = vmatpush.msra.mxu0 %v101
    %129 = vmatpush.msra.mxu0 %v100
    %130 = vmatpush.msra.mxu0 %v99
    %131 = vmatpush.msra.mxu0 %v98
    %132 = vmatpush.msra.mxu0 %v97
    %133 = vmatmul.f32.gmra.mxu0 %v96
    %v134 = vpop.f32.mrf.mxu0
    %v135 = vadd.f32 %v115, %v134
    %136 = vdwg.mxu0
    %v137 = vmax.f32 %v135, 0.0
    %v138 = vld [vmem:[#allocation5] sm:$0xff]
    %v139 = vld [vmem:[#allocation5 + $0x8] sm:$0xff]
    %v140 = vld [vmem:[#allocation5 + $0x10] sm:$0xff]
    %v141 = vld [vmem:[#allocation5 + $0x18] sm:$0xff]
    %v142 = vld [vmem:[#allocation5 + $0x20] sm:$0xff]
    %v143 = vld [vmem:[#allocation5 + $0x28] sm:$0xff]
    %v144 = vld [vmem:[#allocation5 + $0x30] sm:$0xff]
    %v145 = vld [vmem:[#allocation5 + $0x38] sm:$0xff]
    %v146 = vld [vmem:[#allocation5 + $0x40] sm:$0xff]
    %v147 = vld [vmem:[#allocation5 + $0x48] sm:$0xff]
    %v148 = vld [vmem:[#allocation5 + $0x50] sm:$0xff]
    %v149 = vld [vmem:[#allocation5 + $0x58] sm:$0xff]
    %v150 = vld [vmem:[#allocation5 + $0x60] sm:$0xff]
    %v151 = vld [vmem:[#allocation5 + $0x68] sm:$0xff]
    %v152 = vld [vmem:[#allocation5 + $0x70] sm:$0xff]
    %v153 = vld [vmem:[#allocation5 + $0x78] sm:$0xff]
    %v154 = vld [vmem:[%s5] sm:$0x1]
    %v156 = vperm.slane %v154, 0
    %158 = vmatpush.msra.mxu0 %v153
    %159 = vmatpush.msra.mxu0 %v152
    %160 = vmatpush.msra.mxu0 %v151
    %161 = vmatpush.msra.mxu0 %v150
    %162 = vmatpush.msra.mxu0 %v149
    %163 = vmatpush.msra.mxu0 %v148
    %164 = vmatpush.msra.mxu0 %v147
    %165 = vmatpush.msra.mxu0 %v146
    %166 = vmatpush.msra.mxu0 %v145
    %167 = vmatpush.msra.mxu0 %v144
    %168 = vmatpush.msra.mxu0 %v143
    %169 = vmatpush.msra.mxu0 %v142
    %170 = vmatpush.msra.mxu0 %v141
    %171 = vmatpush.msra.mxu0 %v140
    %172 = vmatpush.msra.mxu0 %v139
    %173 = vmatpush.msra.mxu0 %v138
    %174 = vmatmul.f32.gmra.mxu0 %v137
    %v175 = vpop.f32.mrf.mxu0
    %v176 = vadd.f32 %v156, %v175
    %177 = vdwg.mxu0
    %v178 = vmax.f32 %v176, 0.0
    %v179 = vld [vmem:[#allocation7] sm:$0xff]
    %v180 = vld [vmem:[#allocation7 + $0x8] sm:$0xff]
    %v181 = vld [vmem:[#allocation7 + $0x10] sm:$0xff]
    %v182 = vld [vmem:[#allocation7 + $0x18] sm:$0xff]
    %v183 = vld [vmem:[#allocation7 + $0x20] sm:$0xff]
    %v184 = vld [vmem:[#allocation7 + $0x28] sm:$0xff]
    %v185 = vld [vmem:[#allocation7 + $0x30] sm:$0xff]
    %v186 = vld [vmem:[#allocation7 + $0x38] sm:$0xff]
    %v187 = vld [vmem:[%s7] sm:$0x1]
    %v189 = vperm.slane %v187, 0
    %vm191 = vcmask 523264
    %v193 = vsel %vm191, %v178, 0
    %195 = vmatpush.msra.mxu0 0.0
    %196 = vmatpush.msra.mxu0 0.0
    %197 = vmatpush.msra.mxu0 0.0
    %198 = vmatpush.msra.mxu0 0.0
    %199 = vmatpush.msra.mxu0 0.0
    %200 = vmatpush.msra.mxu0 0.0
    %201 = vmatpush.msra.mxu0 0.0
    %202 = vmatpush.msra.mxu0 0.0
    %203 = vmatpush.msra.mxu0 %v186
    %204 = vmatpush.msra.mxu0 %v185
    %205 = vmatpush.msra.mxu0 %v184
    %206 = vmatpush.msra.mxu0 %v183
    %207 = vmatpush.msra.mxu0 %v182
    %208 = vmatpush.msra.mxu0 %v181
    %209 = vmatpush.msra.mxu0 %v180
    %210 = vmatpush.msra.mxu0 %v179
    %211 = vmatmul.f32.gmra.mxu0 %v193
    %v212 = vpop.f32.mrf.mxu0
    %v213 = vadd.f32 %v189, %v212
    %214 = vdwg.mxu0
    %v215 = vcvt.s32.f32 %v81
    %v216 = vlaneseq
    %v217 = vshrl.u32 %v216, 7
    %v218 = vld [vmem:[%s8] sm:$0xff]
    %vm219 = vcmp.gt.f32.partialorder %v218, 0.0
    %v220 = vsel %vm219, 1, 0
    %v221 = vperm.slane %v220, 0
    %vm222 = vcmp.eq.s32.totalorder %v221, 1
    %v223 = vsel %vm222, %v213, -1e+30
    %224 = vmax.xlane.f32.xlu0 %v223
    %v225 = vpop.xlane.xlu0 %224
    %vm226 = vcmp.eq.f32.partialorder %v223, %v225
    %v227 = vsel %vm226, %v215, 128.0
    %228 = vmin.xlane.f32.xlu0 %v227
    %v229 = vpop.xlane.xlu0 %228
    %vm230 = vcmp.eq.f32.partialorder %v215, 0.0
    %v231 = vsel %vm230, 1, 0
    %vm232 = vcmp.eq.s32.totalorder %v231, 1
    %v233 = vsel %vm232, %v229, 0.0
    %v234 = vperm.slane %v220, 1
    %vm235 = vcmp.eq.s32.totalorder %v234, 1
    %v236 = vsel %vm235, %v213, -1e+30
    %237 = vmax.xlane.f32.xlu0 %v236
    %v238 = vpop.xlane.xlu0 %237
    %vm239 = vcmp.eq.f32.partialorder %v236, %v238
    %v240 = vsel %vm239, %v215, 128.0
    %241 = vmin.xlane.f32.xlu0 %v240
    %v242 = vpop.xlane.xlu0 %241
    %vm243 = vcmp.eq.f32.partialorder %v215, 1.0
    %v244 = vsel %vm243, 1, 0
    %vm245 = vcmp.eq.s32.totalorder %v244, 1
    %v246 = vsel %vm245, %v242, %v233
    %v247 = vperm.slane %v220, 2
    %vm248 = vcmp.eq.s32.totalorder %v247, 1
    %v249 = vsel %vm248, %v213, -1e+30
    %250 = vmax.xlane.f32.xlu0 %v249
    %v251 = vpop.xlane.xlu0 %250
    %vm252 = vcmp.eq.f32.partialorder %v249, %v251
    %v253 = vsel %vm252, %v215, 128.0
    %254 = vmin.xlane.f32.xlu0 %v253
    %v255 = vpop.xlane.xlu0 %254
    %vm256 = vcmp.eq.f32.partialorder %v215, 2.0
    %v257 = vsel %vm256, 1, 0
    %vm258 = vcmp.eq.s32.totalorder %v257, 1
    %v259 = vsel %vm258, %v255, %v246
    %v260 = vperm.slane %v220, 3
    %vm261 = vcmp.eq.s32.totalorder %v260, 1
    %v262 = vsel %vm261, %v213, -1e+30
    %263 = vmax.xlane.f32.xlu0 %v262
    %v264 = vpop.xlane.xlu0 %263
    %vm265 = vcmp.eq.f32.partialorder %v262, %v264
    %v266 = vsel %vm265, %v215, 128.0
    %267 = vmin.xlane.f32.xlu0 %v266
    %v268 = vpop.xlane.xlu0 %267
    %vm269 = vcmp.eq.f32.partialorder %v215, 3.0
    %v270 = vsel %vm269, 1, 0
    %vm271 = vcmp.eq.s32.totalorder %v270, 1
    %v272 = vsel %vm271, %v268, %v259
    %v273 = vperm.slane %v220, 4
    %vm274 = vcmp.eq.s32.totalorder %v273, 1
    %v275 = vsel %vm274, %v213, -1e+30
    %276 = vmax.xlane.f32.xlu0 %v275
    %v277 = vpop.xlane.xlu0 %276
    %vm278 = vcmp.eq.f32.partialorder %v275, %v277
    %v279 = vsel %vm278, %v215, 128.0
    %280 = vmin.xlane.f32.xlu0 %v279
    %v281 = vpop.xlane.xlu0 %280
    %vm282 = vcmp.eq.f32.partialorder %v215, 4.0
    %v283 = vsel %vm282, 1, 0
    %vm284 = vcmp.eq.s32.totalorder %v283, 1
    %v285 = vsel %vm284, %v281, %v272
    %v286 = vperm.slane %v220, 5
    %vm287 = vcmp.eq.s32.totalorder %v286, 1
    %v288 = vsel %vm287, %v213, -1e+30
    %289 = vmax.xlane.f32.xlu0 %v288
    %v290 = vpop.xlane.xlu0 %289
    %vm291 = vcmp.eq.f32.partialorder %v288, %v290
    %v292 = vsel %vm291, %v215, 128.0
    %293 = vmin.xlane.f32.xlu0 %v292
    %v294 = vpop.xlane.xlu0 %293
    %vm295 = vcmp.eq.f32.partialorder %v215, 5.0
    %v296 = vsel %vm295, 1, 0
    %vm297 = vcmp.eq.s32.totalorder %v296, 1
    %v298 = vsel %vm297, %v294, %v285
    %v299 = vperm.slane %v220, 6
    %vm300 = vcmp.eq.s32.totalorder %v299, 1
    %v301 = vsel %vm300, %v213, -1e+30
    %302 = vmax.xlane.f32.xlu0 %v301
    %v303 = vpop.xlane.xlu0 %302
    %vm304 = vcmp.eq.f32.partialorder %v301, %v303
    %v305 = vsel %vm304, %v215, 128.0
    %306 = vmin.xlane.f32.xlu0 %v305
    %v307 = vpop.xlane.xlu0 %306
    %vm308 = vcmp.eq.f32.partialorder %v215, 6.0
    %v309 = vsel %vm308, 1, 0
    %vm310 = vcmp.eq.s32.totalorder %v309, 1
    %v311 = vsel %vm310, %v307, %v298
    %v312 = vperm.slane %v220, 7
    %vm313 = vcmp.eq.s32.totalorder %v312, 1
    %v314 = vsel %vm313, %v213, -1e+30
    %315 = vmax.xlane.f32.xlu0 %v314
    %v316 = vpop.xlane.xlu0 %315
    %vm317 = vcmp.eq.f32.partialorder %v314, %v316
    %v318 = vsel %vm317, %v215, 128.0
    %319 = vmin.xlane.f32.xlu0 %v318
    %v320 = vpop.xlane.xlu0 %319
    %vm321 = vcmp.eq.f32.partialorder %v215, 7.0
    %v322 = vsel %vm321, 1, 0
    %vm323 = vcmp.eq.s32.totalorder %v322, 1
    %v324 = vsel %vm323, %v320, %v311
    %v325 = vsel %vm230, %v324, 0.0
    %vm326 = vcmask 1040384
    %v327 = vsel %vm326, %v325, 0.0
    %328 = vadd.xlane.f32.xlu0 %v327
    %v329 = vpop.xlane.xlu0 %328
    %vm330 = vcmp.eq.s32.totalorder %v217, 1
    %v331 = vperm.slane %v329, 0
    %v332 = vsel %vm330, %v331, 0.0
    %vm333 = vcmp.eq.f32.partialorder %v215, %v329
    %v335 = vrot.slane %v324, 1
    %v337 = vsel %vm333, %v335, 0.0
    %v338 = vsel %vm326, %v337, 0.0
    %339 = vadd.xlane.f32.xlu0 %v338
    %v340 = vpop.xlane.xlu0 %339
    %vm341 = vcmp.eq.s32.totalorder %v217, 2
    %v342 = vperm.slane %v340, 0
    %v343 = vsel %vm341, %v342, %v332
    %vm344 = vcmp.eq.f32.partialorder %v215, %v340
    %v345 = vrot.slane %v324, 2
    %v347 = vsel %vm344, %v345, 0.0
    %v348 = vsel %vm326, %v347, 0.0
    %349 = vadd.xlane.f32.xlu0 %v348
    %v350 = vpop.xlane.xlu0 %349
    %vm351 = vcmp.eq.s32.totalorder %v217, 3
    %v352 = vperm.slane %v350, 0
    %v353 = vsel %vm351, %v352, %v343
    %vm354 = vcmp.eq.f32.partialorder %v215, %v350
    %v355 = vrot.slane %v324, 3
    %v357 = vsel %vm354, %v355, 0.0
    %v358 = vsel %vm326, %v357, 0.0
    %359 = vadd.xlane.f32.xlu0 %v358
    %v360 = vpop.xlane.xlu0 %359
    %vm361 = vcmp.eq.s32.totalorder %v217, 4
    %v362 = vperm.slane %v360, 0
    %v363 = vsel %vm361, %v362, %v353
    %vm364 = vcmp.eq.f32.partialorder %v215, %v360
    %v365 = vrot.slane %v324, 4
    %v367 = vsel %vm364, %v365, 0.0
    %v368 = vsel %vm326, %v367, 0.0
    %369 = vadd.xlane.f32.xlu0 %v368
    %v370 = vpop.xlane.xlu0 %369
    %vm371 = vcmp.eq.s32.totalorder %v217, 5
    %v372 = vperm.slane %v370, 0
    %v373 = vsel %vm371, %v372, %v363
    %vm374 = vcmp.eq.f32.partialorder %v215, %v370
    %v375 = vrot.slane %v324, 5
    %v377 = vsel %vm374, %v375, 0.0
    %v378 = vsel %vm326, %v377, 0.0
    %379 = vadd.xlane.f32.xlu0 %v378
    %v380 = vpop.xlane.xlu0 %379
    %vm381 = vcmp.eq.s32.totalorder %v217, 6
    %v382 = vperm.slane %v380, 0
    %v383 = vsel %vm381, %v382, %v373
    %vm384 = vcmp.eq.f32.partialorder %v215, %v380
    %v385 = vrot.slane %v324, 6
    %v387 = vsel %vm384, %v385, 0.0
    %v388 = vsel %vm326, %v387, 0.0
    %389 = vadd.xlane.f32.xlu0 %v388
    %v390 = vpop.xlane.xlu0 %389
    %vm391 = vcmp.eq.s32.totalorder %v217, 7
    %v392 = vperm.slane %v390, 0
    %v393 = vsel %vm391, %v392, %v383
    %vm394 = vcmp.eq.f32.partialorder %v393, 0.0
    %v395 = vsel %vm394, 1, 0
    %vm396 = vcmp.eq.s32.totalorder %v395, 1
    %v397 = vperm.slane %v218, 0
    %v398 = vsel %vm396, %v397, 0.0
    %vm399 = vcmp.eq.f32.partialorder %v393, 1.0
    %v400 = vsel %vm399, 1, 0
    %vm401 = vcmp.eq.s32.totalorder %v400, 1
    %v402 = vperm.slane %v218, 1
    %v403 = vsel %vm401, %v402, %v398
    %vm404 = vcmp.eq.f32.partialorder %v393, 2.0
    %v405 = vsel %vm404, 1, 0
    %vm406 = vcmp.eq.s32.totalorder %v405, 1
    %v407 = vperm.slane %v218, 2
    %v408 = vsel %vm406, %v407, %v403
    %vm409 = vcmp.eq.f32.partialorder %v393, 3.0
    %v410 = vsel %vm409, 1, 0
    %vm411 = vcmp.eq.s32.totalorder %v410, 1
    %v412 = vperm.slane %v218, 3
    %v413 = vsel %vm411, %v412, %v408
    %vm414 = vcmp.eq.f32.partialorder %v393, 4.0
    %v415 = vsel %vm414, 1, 0
    %vm416 = vcmp.eq.s32.totalorder %v415, 1
    %v417 = vperm.slane %v218, 4
    %v418 = vsel %vm416, %v417, %v413
    %vm419 = vcmp.eq.f32.partialorder %v393, 5.0
    %v420 = vsel %vm419, 1, 0
    %vm421 = vcmp.eq.s32.totalorder %v420, 1
    %v422 = vperm.slane %v218, 5
    %v423 = vsel %vm421, %v422, %v418
    %vm424 = vcmp.eq.f32.partialorder %v393, 6.0
    %v425 = vsel %vm424, 1, 0
    %vm426 = vcmp.eq.s32.totalorder %v425, 1
    %v427 = vperm.slane %v218, 6
    %v428 = vsel %vm426, %v427, %v423
    %vm429 = vcmp.eq.f32.partialorder %v393, 7.0
    %v430 = vsel %vm429, 1, 0
    %vm431 = vcmp.eq.s32.totalorder %v430, 1
    %v432 = vperm.slane %v218, 7
    %v433 = vsel %vm431, %v432, %v428
    %v434 = vsub.f32 1.0, %v433
    %v435 = vmul.f32 %v434, 10.0
    %v436 = vsub.f32 %v213, %v435
    %437 = vst [vmem:[#allocation8] sm:$0xff] %v436
    // Predicated region
    $region50: #{_forward.1} parent=1 // pred_check
      _
    $region51: #{_forward.1} parent=1 // pred_check_branch
      %439 = sbr.rel (0) target = $region53
    $region52: #{_forward.1} parent=1 // pred_region
      %441 = vsyncadd [#allocation4], 0
      %s443 = sshll.u32 [#allocation8], 4
      %s444 = int_to_ptr.vmem [resolvable:$true] %s443
      %s445 = sshll.u32 %s9, 4
      %s446 = int_to_ptr.hbm [resolvable:$true] %s445
      %448 = dma.vmem_to_hbm [thread:$0]  %s444, 128, %s446, [#allocation4]
    $region53: #{_forward.1} parent=1 // pred_fallthru
      _
    // Predicated region
    $region54: #{_forward.1} parent=1 // pred_check
      _
    $region55: #{_forward.1} parent=1 // pred_check_branch
      %450 = sbr.rel (0) target = $region57
    $region56: #{_forward.1} parent=1 // pred_region
      %452 = dma.done [#allocation4], 128
    $region57: #{_forward.1} parent=1 // pred_fallthru
      _
    %453 = vsyncpa [#allocation3], 1
    %454 = vsyncpa [#allocation6], 1
    %455 = vsyncpa [#allocation4], 1

</llo_original>
